<compile_context>
chip_gen: v5e
topology: v5e:2x2
jax: 0.10.0
libtpu: 0.0.40
codegen_flags: <defaults>
</compile_context>

<pallas_src>
import functools

import jax
import jax.numpy as jnp
from jax.experimental import pallas as pl
from jax.experimental.pallas import tpu as pltpu


def sdpa_kernel(q_ref, k_ref, v_ref, cq_ref, sq_ref, ck_ref, sk_ref,
                *out_and_scratch, mxu_dtype, exp_in_bf16, return_attn):
    if return_attn:
        out_ref, attn_ref, kr_ref = out_and_scratch
    else:
        out_ref, kr_ref = out_and_scratch
        attn_ref = None

    G, Dk, Lk = k_ref.shape

    # ---- rotated-K cache: the K block does not change along the inner q-tile
    # grid axis ("arbitrary"), so rotate it once per head group and reuse.
    @pl.when(pl.program_id(1) == 0)
    def _rotate_k():
        k = k_ref[...]                                        # [G, Dk, Lk]
        sub = jax.lax.broadcasted_iota(jnp.int32, (1, Dk, 1), 1)
        even = (sub % 2) == 0
        k_next = pltpu.roll(k, shift=Dk - 1, axis=1)          # k[d+1] (even d)
        k_prev = pltpu.roll(k, shift=1, axis=1)               # k[d-1] (odd  d)
        # the '-' on even rows is folded into sk (wrapper-side sign folding)
        kr = k * ck_ref[...] + jnp.where(even, k_next, k_prev) * sk_ref[...]
        kr_ref[...] = kr.astype(kr_ref.dtype)

    # ---- RoPE on the q tile (softmax scale already folded into cq/sq tables).
    q = q_ref[...]                                            # [G, tq, Dk]
    lane = jax.lax.broadcasted_iota(jnp.int32, (1, 1, Dk), 2)
    even_l = (lane % 2) == 0
    q_next = pltpu.roll(q, shift=Dk - 1, axis=2)
    q_prev = pltpu.roll(q, shift=1, axis=2)
    qr = q * cq_ref[...] + jnp.where(even_l, q_next, q_prev) * sq_ref[...]

    # ---- QK^T: [G,tq,Dk] x [G,Dk,Lk] -> [G,tq,Lk]; MXU-dtype operands,
    # f32 accumulation, no in-kernel transpose.
    scores = jax.lax.dot_general(
        qr.astype(mxu_dtype), kr_ref[...],
        dimension_numbers=(((2,), (1,)), ((0,), (0,))),
        preferred_element_type=jnp.float32)                   # [G, tq, Lk]

    # ---- softmax (row-max in f32; exp optionally in bf16 for bf16 inputs).
    m = jnp.max(scores, axis=-1, keepdims=True)
    x = scores - m
    if exp_in_bf16:
        e = jnp.exp(x.astype(jnp.bfloat16))
        denom = jnp.sum(e.astype(jnp.float32), axis=-1, keepdims=True)
    else:
        e = jnp.exp(x)
        denom = jnp.sum(e, axis=-1, keepdims=True)
    # EUP approx reciprocal + one Newton step on the tiny [G, tq, 1] tensor.
    r = pl.reciprocal(denom, approx=True)
    r = r * (2.0 - denom * r)
    attn = e * r.astype(e.dtype)                              # [G, tq, Lk]

    # ---- PV matmul.
    out = jax.lax.dot_general(
        attn.astype(mxu_dtype), v_ref[...].astype(mxu_dtype),
        dimension_numbers=(((2,), (1,)), ((0,), (0,))),
        preferred_element_type=jnp.float32)                   # [G, tq, Dv]

    out_ref[...] = out.astype(out_ref.dtype)
    if return_attn:
        attn_ref[...] = attn.astype(attn_ref.dtype)


def _vmem_budgets():
    """Generation-aware VMEM sizing (v5e/v6e: 128 MiB, v7x: 64 MiB per TC)."""
    try:
        cap = int(pltpu.get_tpu_info().vmem_capacity_bytes)
    except Exception:
        cap = 64 * 1024 * 1024                         # conservative (v7x) fallback
    tile_budget = cap // 4                             # per-step working-set target
    vmem_limit = min(3 * cap // 4, 96 * 1024 * 1024)   # scoped-VMEM ceiling w/ headroom
    return tile_budget, vmem_limit


def _choose_tiling(BH, Lq, Lk, Dk, Dv, itemsize, mxu_itemsize, return_attn, budget_bytes):
    """Pick (head-group size G, q-tile tq): deepest dtype-legal q tile first
    (keeps the MXU M dim fed and amortizes the per-step epilogue), then the
    widest head group that still fits the VMEM budget.  G is capped at BH//2 so
    the 'parallel' head-group axis always has >=2 steps for v7x's two
    TensorCores (negligible cost on single-TC v5e/v6e)."""
    min_sub = {4: 8, 2: 16, 1: 32}.get(itemsize, 8)    # dtype-aware sublane multiple

    def divisors_desc(n):
        return [d for d in range(n, 0, -1) if n % d == 0]

    def step_bytes(g, t):
        in_blk = g * (t * Dk + Dk * Lk + Lk * Dv) * itemsize
        out_blk = g * t * Dv * itemsize + (g * t * Lk * itemsize if return_attn else 0)
        tables = (2 * t * Dk + 2 * Dk * Lk) * 4
        inter = g * t * (2 * Lk + Dk) * 4              # f32 scores + exp + rotated q
        scratch = g * Dk * Lk * mxu_itemsize           # rotated-K cache
        return 2 * (in_blk + out_blk + tables) + inter + scratch   # x2: double buffering

    g_cands = [g for g in divisors_desc(BH) if BH < 2 or g <= BH // 2]
    for t in divisors_desc(Lq):
        if t != Lq and t % min_sub != 0:
            continue
        for g in g_cands:
            if step_bytes(g, t) <= budget_bytes:
                return g, t
    # Fallback: single head with the smallest legal q tile.
    for t in sorted(divisors_desc(Lq)):
        if t == Lq or t % min_sub == 0:
            return 1, t
    return 1, Lq


def scaled_dot_product_attention(q, k, v, *, scale, return_attn=True, mxu_bf16=False):
    """q: [B,H,Lq,Dk], k: [B,H,Dk,Lk], v: [B,H,Lk,Dv]
    -> (output [B,H,Lq,Dv], attn [B,H,Lq,Lk]) or output only if return_attn=False."""
    B, H, Lq, Dk = q.shape
    Lk = k.shape[-1]
    Dv = v.shape[-1]
    assert Lq == Lk, "reference RoPE applies one positional table to q and k (self-attention)"
    assert Dk % 2 == 0

    BH = B * H
    qf = q.reshape(BH, Lq, Dk)
    kf = k.reshape(BH, Dk, Lk)          # K stays in its native [Dk, Lk] layout: no transpose pass
    vf = v.reshape(BH, Lk, Dv)

    # Interleaved sinusoidal tables (identical for every batch/head):
    #   cos = [c0,c0,c1,c1,...]; sin sign-folded: [-s0,+s0,-s1,+s1,...]
    # q-side tables additionally carry the softmax scale; k-side tables are
    # transposed to [Dk, L] to match K's native layout.
    pos = jnp.arange(Lq, dtype=jnp.float32)[:, None]
    ids = jnp.arange(Dk // 2, dtype=jnp.float32)
    theta = jnp.power(10000.0, -2.0 * ids / Dk)
    ang = pos * theta                                                    # [L, Dk//2]
    cos_tab = jnp.repeat(jnp.cos(ang), 2, axis=-1)                       # [L, Dk]
    sign = jnp.where(jnp.arange(Dk) % 2 == 0, -1.0, 1.0).astype(jnp.float32)
    sin_tab = jnp.repeat(jnp.sin(ang), 2, axis=-1) * sign                # [L, Dk]
    cq = cos_tab * float(scale)
    sq = sin_tab * float(scale)
    ck = cos_tab.T                                                       # [Dk, L]
    sk = sin_tab.T                                                       # [Dk, L]

    in_dtype = q.dtype
    mxu_dtype = jnp.bfloat16 if (mxu_bf16 and in_dtype == jnp.float32) else in_dtype
    exp_in_bf16 = bool(in_dtype == jnp.bfloat16) or bool(jnp.dtype(mxu_dtype) == jnp.bfloat16)

    tile_budget, vmem_limit = _vmem_budgets()
    G, tq = _choose_tiling(BH, Lq, Lk, Dk, Dv, q.dtype.itemsize,
                           jnp.dtype(mxu_dtype).itemsize, return_attn, tile_budget)
    grid = (BH // G, Lq // tq)

    kernel = functools.partial(sdpa_kernel, mxu_dtype=mxu_dtype,
                               exp_in_bf16=exp_in_bf16, return_attn=return_attn)

    out_shape = [jax.ShapeDtypeStruct((BH, Lq, Dv), in_dtype)]
    out_specs = [pl.BlockSpec((G, tq, Dv), lambda i, j: (i, j, 0))]
    if return_attn:
        # TODO(synk): if attn must be kept at long L, pipeline_mode=pl.Buffered(3)
        # on this spec can further hide (not remove) the O(L^2) writeback.
        out_shape.append(jax.ShapeDtypeStruct((BH, Lq, Lk), in_dtype))
        out_specs.append(pl.BlockSpec((G, tq, Lk), lambda i, j: (i, j, 0)))

    results = pl.pallas_call(
        kernel,
        out_shape=tuple(out_shape),
        grid_spec=pltpu.PrefetchScalarGridSpec(
            num_scalar_prefetch=0,
            grid=grid,
            in_specs=[
                pl.BlockSpec((G, tq, Dk), lambda i, j: (i, j, 0)),   # q
                pl.BlockSpec((G, Dk, Lk), lambda i, j: (i, 0, 0)),   # k (native [Dk, Lk])
                pl.BlockSpec((G, Lk, Dv), lambda i, j: (i, 0, 0)),   # v
                pl.BlockSpec((tq, Dk), lambda i, j: (j, 0)),         # cos_q (pre-scaled)
                pl.BlockSpec((tq, Dk), lambda i, j: (j, 0)),         # sin_q (pre-scaled, signed)
                pl.BlockSpec((Dk, Lk), lambda i, j: (0, 0)),         # cos_k
                pl.BlockSpec((Dk, Lk), lambda i, j: (0, 0)),         # sin_k (signed)
            ],
            out_specs=out_specs,
            scratch_shapes=[pltpu.VMEM((G, Dk, Lk), mxu_dtype)],     # rotated-K cache
        ),
        compiler_params=pltpu.CompilerParams(
            # head-group axis 'parallel' (megacore / v7x 2-TC sharding); q-tile
            # axis 'arbitrary' so the rotated-K scratch cache is valid across it.
            dimension_semantics=("parallel", "arbitrary"),
            vmem_limit_bytes=int(vmem_limit),
        ),
    )(qf, kf, vf, cq, sq, ck, sk)

    if return_attn:
        out, attn = results
        return out.reshape(B, H, Lq, Dv), attn.reshape(B, H, Lq, Lk)
    out = results[0] if isinstance(results, (tuple, list)) else results
    return out.reshape(B, H, Lq, Dv)


# ---------------- pure-JAX reference (mirrors the PyTorch forward) ----------------
def _ref_rope(x):
    B, H, L, D = x.shape
    pos = jnp.arange(L, dtype=jnp.float32)[:, None]
    ids = jnp.arange(D // 2, dtype=jnp.float32)
    theta = jnp.power(10000.0, -2.0 * ids / D)
    ang = pos * theta
    cos = jnp.repeat(jnp.cos(ang), 2, axis=-1)[None, None]
    sin = jnp.repeat(jnp.sin(ang), 2, axis=-1)[None, None]
    x2 = jnp.stack([-x[..., 1::2], x[..., ::2]], axis=-1).reshape(x.shape)
    return x * cos + x2 * sin


def ref_forward(q, k, v, scale):
    kt = jnp.swapaxes(k, -1, -2)
    qr = _ref_rope(q)
    kr = _ref_rope(kt)
    scores = jnp.einsum("bhqd,bhkd->bhqk", qr, kr) * scale
    attn = jax.nn.softmax(scores, axis=-1)
    out = jnp.einsum("bhqk,bhkd->bhqd", attn, v)
    return out, attn


if __name__ == "__main__":
    B, H, L, Dk, Dv = 2, 4, 8, 32, 32        # d_model = H * Dk = 128
    scale = Dk ** (-0.5)                     # nn.Parameter(head_dim ** -0.5), lsa=False

    key = jax.random.PRNGKey(0)
    kq, kk, kv = jax.random.split(key, 3)
    q = jax.random.normal(kq, (B, H, L, Dk), dtype=jnp.float32)
    k = jax.random.normal(kk, (B, H, Dk, L), dtype=jnp.float32)
    v = jax.random.normal(kv, (B, H, L, Dv), dtype=jnp.float32)

    out, attn = scaled_dot_product_attention(q, k, v, scale=scale)
    out = jax.block_until_ready(out)
    attn = jax.block_until_ready(attn)

    out_ref, attn_ref = ref_forward(q, k, v, scale)
    assert jnp.allclose(out, out_ref, rtol=1e-4, atol=1e-4), "output mismatch"
    assert jnp.allclose(attn, attn_ref, rtol=1e-4, atol=1e-4), "attn mismatch"

    # also exercise the attn-dropped fast path (no O(L^2) writeback)
    out_only = jax.block_until_ready(
        scaled_dot_product_attention(q, k, v, scale=scale, return_attn=False))
    assert jnp.allclose(out_only, out_ref, rtol=1e-4, atol=1e-4), "output (no-attn) mismatch"

    print("KERNEL_OK")
</pallas_src>

<mosaic_0001>
module attributes {stable_mosaic.version = 11 : i64} {
  func.func @sdpa_kernel(%arg0: i32, %arg1: i32, %arg2: memref<4x8x32xf32, #tpu.memory_space<vmem>>, %arg3: memref<4x32x8xf32, #tpu.memory_space<vmem>>, %arg4: memref<4x8x32xf32, #tpu.memory_space<vmem>>, %arg5: memref<8x32xf32, #tpu.memory_space<vmem>>, %arg6: memref<8x32xf32, #tpu.memory_space<vmem>>, %arg7: memref<32x8xf32, #tpu.memory_space<vmem>>, %arg8: memref<32x8xf32, #tpu.memory_space<vmem>>, %arg9: memref<4x8x32xf32, #tpu.memory_space<vmem>>, %arg10: memref<4x8x8xf32, #tpu.memory_space<vmem>>, %arg11: memref<4x32x8xf32, #tpu.memory_space<vmem>>) attributes {dimension_semantics = [#tpu.dimension_semantics<parallel>, #tpu.dimension_semantics<arbitrary>], iteration_bounds = array<i64: 2, 1>, scalar_prefetch = 0 : i64, scratch_operands = 1 : i64, tpu.core_type = #tpu.core_type<tc>, window_params = [{transform_indices = @transform_0, window_bounds = array<i64: 4, 8, 32>}, {transform_indices = @transform_1, window_bounds = array<i64: 4, 32, 8>}, {transform_indices = @transform_2, window_bounds = array<i64: 4, 8, 32>}, {transform_indices = @transform_3, window_bounds = array<i64: 8, 32>}, {transform_indices = @transform_4, window_bounds = array<i64: 8, 32>}, {pipeline_mode = #tpu.pipeline_mode<synchronous>, transform_indices = @transform_5, window_bounds = array<i64: 32, 8>}, {pipeline_mode = #tpu.pipeline_mode<synchronous>, transform_indices = @transform_6, window_bounds = array<i64: 32, 8>}, {transform_indices = @transform_7, window_bounds = array<i64: 4, 8, 32>}, {transform_indices = @transform_8, window_bounds = array<i64: 4, 8, 8>}]} {
    %c0_i32 = arith.constant 0 : i32
    %0 = arith.cmpi eq, %arg1, %c0_i32 : i32
    %1 = arith.extui %0 : i1 to i32
    %c0_i32_0 = arith.constant 0 : i32
    %2 = arith.cmpi ne, %1, %c0_i32_0 : i32
    scf.if %2 {
      %c0_29 = arith.constant 0 : index
      %c0_30 = arith.constant 0 : index
      %c0_31 = arith.constant 0 : index
      %57 = vector.load %arg3[%c0_29, %c0_30, %c0_31] : memref<4x32x8xf32, #tpu.memory_space<vmem>>, vector<4x32x8xf32>
      %58 = tpu.iota {dimensions = array<i32: 1>} : vector<1x32x1xi32>
      %c2_i32_32 = arith.constant 2 : i32
      %c0_i32_33 = arith.constant 0 : i32
      %59 = arith.cmpi eq, %c2_i32_32, %c0_i32_33 : i32
      %c1_i32_34 = arith.constant 1 : i32
      %60 = arith.select %59, %c1_i32_34, %c2_i32_32 : i32
      %61 = vector.broadcast %60 : i32 to vector<1x32x1xi32>
      %62 = arith.remsi %58, %61 : vector<1x32x1xi32>
      %c0_i32_35 = arith.constant 0 : i32
      %63 = vector.broadcast %c0_i32_35 : i32 to vector<1x32x1xi32>
      %64 = arith.cmpi ne, %62, %63 : vector<1x32x1xi32>
      %c0_i32_36 = arith.constant 0 : i32
      %65 = vector.broadcast %c0_i32_36 : i32 to vector<1x32x1xi32>
      %66 = arith.cmpi slt, %62, %65 : vector<1x32x1xi32>
      %c0_i32_37 = arith.constant 0 : i32
      %67 = arith.cmpi slt, %60, %c0_i32_37 : i32
      %68 = vector.broadcast %67 : i1 to vector<1x32x1xi1>
      %69 = vector.broadcast %68 : vector<1x32x1xi1> to vector<1x32x1xi1>
      %70 = arith.xori %66, %69 : vector<1x32x1xi1>
      %71 = arith.andi %70, %64 : vector<1x32x1xi1>
      %72 = vector.broadcast %60 : i32 to vector<1x32x1xi32>
      %73 = arith.addi %62, %72 : vector<1x32x1xi32>
      %74 = arith.select %71, %73, %62 : vector<1x32x1xi1>, vector<1x32x1xi32>
      %c0_i32_38 = arith.constant 0 : i32
      %75 = vector.broadcast %c0_i32_38 : i32 to vector<1x32x1xi32>
      %76 = arith.cmpi eq, %74, %75 : vector<1x32x1xi32>
      %c31_i32_39 = arith.constant 31 : i32
      %77 = tpu.dynamic_rotate %57 by %c31_i32_39 dim 1 : vector<4x32x8xf32>, i32 -> vector<4x32x8xf32>
      %c1_i32_40 = arith.constant 1 : i32
      %78 = tpu.dynamic_rotate %57 by %c1_i32_40 dim 1 : vector<4x32x8xf32>, i32 -> vector<4x32x8xf32>
      %c0_41 = arith.constant 0 : index
      %c0_42 = arith.constant 0 : index
      %79 = vector.load %arg7[%c0_41, %c0_42] : memref<32x8xf32, #tpu.memory_space<vmem>>, vector<32x8xf32>
      %80 = vector.shape_cast %79 : vector<32x8xf32> to vector<1x32x8xf32>
      %81 = vector.broadcast %80 : vector<1x32x8xf32> to vector<4x32x8xf32>
      %82 = arith.mulf %57, %81 : vector<4x32x8xf32>
      %83 = vector.shape_cast %76 : vector<1x32x1xi1> to vector<1x32x1xi1>
      %84 = vector.broadcast %83 : vector<1x32x1xi1> to vector<4x32x8xi1>
      %85 = arith.select %84, %77, %78 : vector<4x32x8xi1>, vector<4x32x8xf32>
      %c0_43 = arith.constant 0 : index
      %c0_44 = arith.constant 0 : index
      %86 = vector.load %arg8[%c0_43, %c0_44] : memref<32x8xf32, #tpu.memory_space<vmem>>, vector<32x8xf32>
      %87 = vector.shape_cast %86 : vector<32x8xf32> to vector<1x32x8xf32>
      %88 = vector.broadcast %87 : vector<1x32x8xf32> to vector<4x32x8xf32>
      %89 = arith.mulf %85, %88 : vector<4x32x8xf32>
      %90 = arith.addf %82, %89 : vector<4x32x8xf32>
      %c0_45 = arith.constant 0 : index
      %c0_46 = arith.constant 0 : index
      %c0_47 = arith.constant 0 : index
      %91 = vector.load %arg11[%c0_45, %c0_46, %c0_47] : memref<4x32x8xf32, #tpu.memory_space<vmem>>, vector<4x32x8xf32>
      tpu.vector_store %arg11[%c0_45, %c0_46, %c0_47], %90 {strides = array<i32>} : memref<4x32x8xf32, #tpu.memory_space<vmem>>, vector<4x32x8xf32>,
    } else {
    }
    %c0 = arith.constant 0 : index
    %c0_1 = arith.constant 0 : index
    %c0_2 = arith.constant 0 : index
    %3 = vector.load %arg2[%c0, %c0_1, %c0_2] : memref<4x8x32xf32, #tpu.memory_space<vmem>>, vector<4x8x32xf32>
    %4 = tpu.iota {dimensions = array<i32: 2>} : vector<1x1x32xi32>
    %c2_i32 = arith.constant 2 : i32
    %c0_i32_3 = arith.constant 0 : i32
    %5 = arith.cmpi eq, %c2_i32, %c0_i32_3 : i32
    %c1_i32 = arith.constant 1 : i32
    %6 = arith.select %5, %c1_i32, %c2_i32 : i32
    %7 = vector.broadcast %6 : i32 to vector<1x1x32xi32>
    %8 = arith.remsi %4, %7 : vector<1x1x32xi32>
    %c0_i32_4 = arith.constant 0 : i32
    %9 = vector.broadcast %c0_i32_4 : i32 to vector<1x1x32xi32>
    %10 = arith.cmpi ne, %8, %9 : vector<1x1x32xi32>
    %c0_i32_5 = arith.constant 0 : i32
    %11 = vector.broadcast %c0_i32_5 : i32 to vector<1x1x32xi32>
    %12 = arith.cmpi slt, %8, %11 : vector<1x1x32xi32>
    %c0_i32_6 = arith.constant 0 : i32
    %13 = arith.cmpi slt, %6, %c0_i32_6 : i32
    %14 = vector.broadcast %13 : i1 to vector<1x1x32xi1>
    %15 = vector.broadcast %14 : vector<1x1x32xi1> to vector<1x1x32xi1>
    %16 = arith.xori %12, %15 : vector<1x1x32xi1>
    %17 = arith.andi %16, %10 : vector<1x1x32xi1>
    %18 = vector.broadcast %6 : i32 to vector<1x1x32xi32>
    %19 = arith.addi %8, %18 : vector<1x1x32xi32>
    %20 = arith.select %17, %19, %8 : vector<1x1x32xi1>, vector<1x1x32xi32>
    %c0_i32_7 = arith.constant 0 : i32
    %21 = vector.broadcast %c0_i32_7 : i32 to vector<1x1x32xi32>
    %22 = arith.cmpi eq, %20, %21 : vector<1x1x32xi32>
    %c31_i32 = arith.constant 31 : i32
    %23 = tpu.dynamic_rotate %3 by %c31_i32 dim 2 : vector<4x8x32xf32>, i32 -> vector<4x8x32xf32>
    %c1_i32_8 = arith.constant 1 : i32
    %24 = tpu.dynamic_rotate %3 by %c1_i32_8 dim 2 : vector<4x8x32xf32>, i32 -> vector<4x8x32xf32>
    %c0_9 = arith.constant 0 : index
    %c0_10 = arith.constant 0 : index
    %25 = vector.load %arg5[%c0_9, %c0_10] : memref<8x32xf32, #tpu.memory_space<vmem>>, vector<8x32xf32>
    %26 = vector.shape_cast %25 : vector<8x32xf32> to vector<1x8x32xf32>
    %27 = vector.broadcast %26 : vector<1x8x32xf32> to vector<4x8x32xf32>
    %28 = arith.mulf %3, %27 : vector<4x8x32xf32>
    %29 = vector.shape_cast %22 : vector<1x1x32xi1> to vector<1x1x32xi1>
    %30 = vector.broadcast %29 : vector<1x1x32xi1> to vector<4x8x32xi1>
    %31 = arith.select %30, %23, %24 : vector<4x8x32xi1>, vector<4x8x32xf32>
    %c0_11 = arith.constant 0 : index
    %c0_12 = arith.constant 0 : index
    %32 = vector.load %arg6[%c0_11, %c0_12] : memref<8x32xf32, #tpu.memory_space<vmem>>, vector<8x32xf32>
    %33 = vector.shape_cast %32 : vector<8x32xf32> to vector<1x8x32xf32>
    %34 = vector.broadcast %33 : vector<1x8x32xf32> to vector<4x8x32xf32>
    %35 = arith.mulf %31, %34 : vector<4x8x32xf32>
    %36 = arith.addf %28, %35 : vector<4x8x32xf32>
    %c0_13 = arith.constant 0 : index
    %c0_14 = arith.constant 0 : index
    %c0_15 = arith.constant 0 : index
    %37 = vector.load %arg11[%c0_13, %c0_14, %c0_15] : memref<4x32x8xf32, #tpu.memory_space<vmem>>, vector<4x32x8xf32>
    %cst = arith.constant dense<0.000000e+00> : vector<4x8x8xf32>
    %38 = tpu.matmul %36, %37, %cst {dimension_numbers = #tpu.dot_dimension_numbers<[2], [1], [1], [2], [0, 0, 0, 1, 1, 2], [0], [0]>} : vector<4x8x32xf32>, vector<4x32x8xf32>, vector<4x8x8xf32> -> vector<4x8x8xf32>
    %cst_16 = arith.constant dense<0xFF800000> : vector<4x8xf32>
    %39 = vector.multi_reduction <maximumf>, %38, %cst_16 [2] : vector<4x8x8xf32> to vector<4x8xf32>
    %40 = vector.shape_cast %39 : vector<4x8xf32> to vector<4x8x1xf32>
    %41 = vector.broadcast %40 : vector<4x8x1xf32> to vector<4x8x8xf32>
    %42 = arith.subf %38, %41 : vector<4x8x8xf32>
    %43 = math.exp %42 : vector<4x8x8xf32>
    %cst_17 = arith.constant dense<0.000000e+00> : vector<4x8xf32>
    %44 = vector.multi_reduction <add>, %43, %cst_17 [2] : vector<4x8x8xf32> to vector<4x8xf32>
    %45 = vector.shape_cast %44 : vector<4x8xf32> to vector<4x8x1xf32>
    %46 = tpu.reciprocal %45 {approx = true} : vector<4x8x1xf32> -> vector<4x8x1xf32>
    %47 = arith.mulf %45, %46 : vector<4x8x1xf32>
    %cst_18 = arith.constant 2.000000e+00 : f32
    %48 = vector.broadcast %cst_18 : f32 to vector<4x8x1xf32>
    %49 = arith.subf %48, %47 : vector<4x8x1xf32>
    %50 = arith.mulf %46, %49 : vector<4x8x1xf32>
    %51 = vector.broadcast %50 : vector<4x8x1xf32> to vector<4x8x8xf32>
    %52 = arith.mulf %43, %51 : vector<4x8x8xf32>
    %c0_19 = arith.constant 0 : index
    %c0_20 = arith.constant 0 : index
    %c0_21 = arith.constant 0 : index
    %53 = vector.load %arg4[%c0_19, %c0_20, %c0_21] : memref<4x8x32xf32, #tpu.memory_space<vmem>>, vector<4x8x32xf32>
    %cst_22 = arith.constant dense<0.000000e+00> : vector<4x8x32xf32>
    %54 = tpu.matmul %52, %53, %cst_22 {dimension_numbers = #tpu.dot_dimension_numbers<[2], [1], [1], [2], [0, 0, 0, 1, 1, 2], [0], [0]>} : vector<4x8x8xf32>, vector<4x8x32xf32>, vector<4x8x32xf32> -> vector<4x8x32xf32>
    %c0_23 = arith.constant 0 : index
    %c0_24 = arith.constant 0 : index
    %c0_25 = arith.constant 0 : index
    %55 = vector.load %arg9[%c0_23, %c0_24, %c0_25] : memref<4x8x32xf32, #tpu.memory_space<vmem>>, vector<4x8x32xf32>
    tpu.vector_store %arg9[%c0_23, %c0_24, %c0_25], %54 {strides = array<i32>} : memref<4x8x32xf32, #tpu.memory_space<vmem>>, vector<4x8x32xf32>,
    %c0_26 = arith.constant 0 : index
    %c0_27 = arith.constant 0 : index
    %c0_28 = arith.constant 0 : index
    %56 = vector.load %arg10[%c0_26, %c0_27, %c0_28] : memref<4x8x8xf32, #tpu.memory_space<vmem>>, vector<4x8x8xf32>
    tpu.vector_store %arg10[%c0_26, %c0_27, %c0_28], %52 {strides = array<i32>} : memref<4x8x8xf32, #tpu.memory_space<vmem>>, vector<4x8x8xf32>,
    return
  }
  func.func @transform_0(%arg0: i32, %arg1: i32) -> (i32, i32, i32) {
    %c0_i32 = arith.constant 0 : i32
    %c0_i32_0 = arith.constant 0 : i32
    return %arg0, %arg1, %c0_i32 : i32, i32, i32
  }
  func.func @transform_1(%arg0: i32, %arg1: i32) -> (i32, i32, i32) {
    %c0_i32 = arith.constant 0 : i32
    %c0_i32_0 = arith.constant 0 : i32
    %c0_i32_1 = arith.constant 0 : i32
    return %arg0, %c0_i32, %c0_i32_0 : i32, i32, i32
  }
  func.func @transform_2(%arg0: i32, %arg1: i32) -> (i32, i32, i32) {
    %c0_i32 = arith.constant 0 : i32
    %c0_i32_0 = arith.constant 0 : i32
    %c0_i32_1 = arith.constant 0 : i32
    return %arg0, %c0_i32, %c0_i32_0 : i32, i32, i32
  }
  func.func @transform_3(%arg0: i32, %arg1: i32) -> (i32, i32) {
    %c0_i32 = arith.constant 0 : i32
    %c0_i32_0 = arith.constant 0 : i32
    return %arg1, %c0_i32 : i32, i32
  }
  func.func @transform_4(%arg0: i32, %arg1: i32) -> (i32, i32) {
    %c0_i32 = arith.constant 0 : i32
    %c0_i32_0 = arith.constant 0 : i32
    return %arg1, %c0_i32 : i32, i32
  }
  func.func @transform_5(%arg0: i32, %arg1: i32) -> (i32, i32) {
    %c0_i32 = arith.constant 0 : i32
    %c0_i32_0 = arith.constant 0 : i32
    %c0_i32_1 = arith.constant 0 : i32
    return %c0_i32, %c0_i32_0 : i32, i32
  }
  func.func @transform_6(%arg0: i32, %arg1: i32) -> (i32, i32) {
    %c0_i32 = arith.constant 0 : i32
    %c0_i32_0 = arith.constant 0 : i32
    %c0_i32_1 = arith.constant 0 : i32
    return %c0_i32, %c0_i32_0 : i32, i32
  }
  func.func @transform_7(%arg0: i32, %arg1: i32) -> (i32, i32, i32) {
    %c0_i32 = arith.constant 0 : i32
    %c0_i32_0 = arith.constant 0 : i32
    return %arg0, %arg1, %c0_i32 : i32, i32, i32
  }
  func.func @transform_8(%arg0: i32, %arg1: i32) -> (i32, i32, i32) {
    %c0_i32 = arith.constant 0 : i32
    %c0_i32_0 = arith.constant 0 : i32
    return %arg0, %arg1, %c0_i32 : i32, i32, i32
  }
}

</mosaic_0001>

<llo_original>
// kernel: tpu_custom_call.1
$region0: #{tpu_custom_call.1}
  #allocation0 [shape = 'u32[]', space=smem, size = 0x4, offset = 0x4, fixed_abs, tag = 'smem constant byte address 0x4 - core index']
  #allocation1 [shape = 'u32[72,128]{1,0:T(1,128)}', space=vmem, size = 0x9000, scoped, tag = 'internal scratch']
  #allocation2 [shape = 'f32[4,32,8]{2,1,0:T(8,128)}', space=vmem, size = 0x10000, scoped, tag = 'scratch operand']
  %s0 = inlined_call_operand.vmem [shape: f32[8,8,32], index: 0, kind: input, shape index: {}]
  %s1 = inlined_call_operand.vmem [shape: f32[8,32,8], index: 1, kind: input, shape index: {}]
  %s2 = inlined_call_operand.vmem [shape: f32[8,8,32], index: 2, kind: input, shape index: {}]
  %s3 = inlined_call_operand.vmem [shape: f32[8,32], index: 3, kind: input, shape index: {}]
  %s4 = inlined_call_operand.vmem [shape: f32[8,32], index: 4, kind: input, shape index: {}]
  %s5 = inlined_call_operand.vmem [shape: f32[32,8], index: 5, kind: input, shape index: {}]
  %s6 = inlined_call_operand.vmem [shape: f32[32,8], index: 6, kind: input, shape index: {}]
  %s7 = inlined_call_operand.hbm [shape: f32[8,8,32], index: 7, kind: output, shape index: {0}]
  %s8 = inlined_call_operand.hbm [shape: f32[8,8,8], index: 8, kind: output, shape index: {1}]
  %9 = xla_tuple %s7, %s8
  %s10 = sld [smem:[#allocation0]]
  $region73: #{tpu_custom_call.1} parent=0
    _
  %s12 = ssub.s32 1, %s10
  %s13 = scalar_select 0, %s12, %s10
  $region1: #{tpu_custom_call.1} parent=0
    #allocation3 [shape = 'u8[32768]{0}', space=vmem, size = 0x8000, scoped, tag = 'output window, operand 0']
    #allocation4 [shape = 's32[2]{0}', space=sflag, size = 0x8, scoped, tag = 'scoped memory for tpu_custom_call.1']
    #allocation5 [shape = 'u8[32768]{0}', space=vmem, size = 0x8000, scoped, tag = 'output window, operand 1']
    #allocation6 [shape = 's32[2]{0}', space=sflag, size = 0x8, scoped, tag = 'scoped memory for tpu_custom_call.1']
    %14 = vsyncpa [#allocation4], 0
    %s15 = scalar_lea.sflag [#allocation4], 1
    %16 = vsyncpa %s15, 0
    %17 = vsyncpa [#allocation6], 0
    %s18 = scalar_lea.sflag [#allocation6], 1
    %19 = vsyncpa %s18, 0
    loop: start=0, step=1, limit=4
    $region2: #{tpu_custom_call.1} parent=1 // loop_pre_header
      _
    $region3: #{tpu_custom_call.1} parent=1 // loop_header
      %s21 = sphi 0, %s25
      %p22 = scmp.ge.s32.totalorder %s21, 4
      %s28 = sphi 0, %s40
      %s29 = sphi 0, %s36
      %s30 = sphi 0, %s28
      %s31 = sphi 0, %s29
      %s32 = sphi 0, %s30
      %s33 = sphi 0, %s31
      %s45 = sphi 0, %s47
      %s48 = sphi 0, %s45
      %s49 = sphi 0, %s48
      %s65 = sphi 0, %s49
      %s71 = sphi 0, %s73
      %s74 = sphi 0, %s71
      %s75 = sphi 0, %s74
      %s91 = sphi 0, %s75
      %s97 = sphi 0, %s99
      %s100 = sphi 0, %s97
      %s101 = sphi 0, %s100
      %s117 = sphi 0, %s101
      %s123 = sphi 0, %s125
      %s126 = sphi 0, %s123
      %s127 = sphi 0, %s126
      %s143 = sphi 0, %s127
      %s149 = sphi 0, %s151
      %s152 = sphi 0, %s149
      %s153 = sphi 0, %s152
      %s169 = sphi 0, %s153
      %s173 = sphi 0, %s173
      %s175 = sphi 0, %s173
      %s176 = sphi 0, %s175
      %s190 = sphi 0, %s176
      %s194 = sphi 0, %s194
      %s196 = sphi 0, %s194
      %s197 = sphi 0, %s196
      %s211 = sphi 0, %s197
      %s219 = sphi 0, %s221
      %s222 = sphi 0, %s219
      %s223 = sphi 0, %s222
      %s239 = sphi 0, %s223
      %s247 = sphi 0, %s249
      %s250 = sphi 0, %s247
      %s251 = sphi 0, %s250
      %s267 = sphi 0, %s251
    $region4: #{tpu_custom_call.1} parent=1 // loop_header_branch
      %24 = sbr.rel (%p22) target = $region8
    $region5: #{tpu_custom_call.1} parent=1 // loop_body
      %s26 = ssub.s32 %s21, 1
      %s27 = ssub.s32 %s21, 2
      %s34 = sadd.s32 1, %s29
      %p35 = scmp.ge.s32.totalorder %s34, 1
      %s36 = scalar_select %p35, 0, %s34
      %s37 = sadd.s32 1, %s28
      %s38 = scalar_select %p35, %s37, %s28
      %p39 = scmp.ge.s32.totalorder %s38, 2
      %s40 = scalar_select %p39, 0, %s38
      %s41 = ssub.s32 %s28, %s40
      %s42 = ssub.s32 %s29, %s36
      %s43 = sor.u32 %s41, %s42
      %p44 = scmp.eq.s32.totalorder %s43, 0
      %s46 = sadd.s32 %s45, 1
      %s47 = scalar_select %p44, %s45, %s46
      %p50 = pneg %p44
      %p51 = scmp.eq.s32.totalorder %s21, 1
      %p52 = por %p50, %p51
      %p53 = scmp.ne.s32.totalorder %s45, %s48
      %p54 = scmp.eq.s32.totalorder %s21, 0
      %p55 = por %p53, %p54
      %p56 = scmp.ne.s32.totalorder %s45, %s48
      %p57 = scmp.eq.s32.totalorder %s26, 1
      %p58 = por %p56, %p57
      %p59 = scmp.ne.s32.totalorder %s48, %s49
      %p60 = scmp.eq.s32.totalorder %s26, 0
      %p61 = por %p59, %p60
      %p62 = scmp.ne.s32.totalorder %s48, %s49
      %p63 = scmp.eq.s32.totalorder %s27, 1
      %p64 = por %p62, %p63
      %p66 = scmp.ne.s32.totalorder %s49, %s65
      %p67 = scmp.eq.s32.totalorder %s27, 0
      %p68 = por %p66, %p67
      %s69 = ssub.s32 %s28, %s40
      %p70 = scmp.eq.s32.totalorder %s69, 0
      %s72 = sadd.s32 %s71, 1
      %s73 = scalar_select %p70, %s71, %s72
      %p76 = pneg %p70
      %p77 = scmp.eq.s32.totalorder %s21, 1
      %p78 = por %p76, %p77
      %p79 = scmp.ne.s32.totalorder %s71, %s74
      %p80 = scmp.eq.s32.totalorder %s21, 0
      %p81 = por %p79, %p80
      %p82 = scmp.ne.s32.totalorder %s71, %s74
      %p83 = scmp.eq.s32.totalorder %s26, 1
      %p84 = por %p82, %p83
      %p85 = scmp.ne.s32.totalorder %s74, %s75
      %p86 = scmp.eq.s32.totalorder %s26, 0
      %p87 = por %p85, %p86
      %p88 = scmp.ne.s32.totalorder %s74, %s75
      %p89 = scmp.eq.s32.totalorder %s27, 1
      %p90 = por %p88, %p89
      %p92 = scmp.ne.s32.totalorder %s75, %s91
      %p93 = scmp.eq.s32.totalorder %s27, 0
      %p94 = por %p92, %p93
      %s95 = ssub.s32 %s28, %s40
      %p96 = scmp.eq.s32.totalorder %s95, 0
      %s98 = sadd.s32 %s97, 1
      %s99 = scalar_select %p96, %s97, %s98
      %p102 = pneg %p96
      %p103 = scmp.eq.s32.totalorder %s21, 1
      %p104 = por %p102, %p103
      %p105 = scmp.ne.s32.totalorder %s97, %s100
      %p106 = scmp.eq.s32.totalorder %s21, 0
      %p107 = por %p105, %p106
      %p108 = scmp.ne.s32.totalorder %s97, %s100
      %p109 = scmp.eq.s32.totalorder %s26, 1
      %p110 = por %p108, %p109
      %p111 = scmp.ne.s32.totalorder %s100, %s101
      %p112 = scmp.eq.s32.totalorder %s26, 0
      %p113 = por %p111, %p112
      %p114 = scmp.ne.s32.totalorder %s100, %s101
      %p115 = scmp.eq.s32.totalorder %s27, 1
      %p116 = por %p114, %p115
      %p118 = scmp.ne.s32.totalorder %s101, %s117
      %p119 = scmp.eq.s32.totalorder %s27, 0
      %p120 = por %p118, %p119
      %s121 = ssub.s32 %s29, %s36
      %p122 = scmp.eq.s32.totalorder %s121, 0
      %s124 = sadd.s32 %s123, 1
      %s125 = scalar_select %p122, %s123, %s124
      %p128 = pneg %p122
      %p129 = scmp.eq.s32.totalorder %s21, 1
      %p130 = por %p128, %p129
      %p131 = scmp.ne.s32.totalorder %s123, %s126
      %p132 = scmp.eq.s32.totalorder %s21, 0
      %p133 = por %p131, %p132
      %p134 = scmp.ne.s32.totalorder %s123, %s126
      %p135 = scmp.eq.s32.totalorder %s26, 1
      %p136 = por %p134, %p135
      %p137 = scmp.ne.s32.totalorder %s126, %s127
      %p138 = scmp.eq.s32.totalorder %s26, 0
      %p139 = por %p137, %p138
      %p140 = scmp.ne.s32.totalorder %s126, %s127
      %p141 = scmp.eq.s32.totalorder %s27, 1
      %p142 = por %p140, %p141
      %p144 = scmp.ne.s32.totalorder %s127, %s143
      %p145 = scmp.eq.s32.totalorder %s27, 0
      %p146 = por %p144, %p145
      %s147 = ssub.s32 %s29, %s36
      %p148 = scmp.eq.s32.totalorder %s147, 0
      %s150 = sadd.s32 %s149, 1
      %s151 = scalar_select %p148, %s149, %s150
      %p154 = pneg %p148
      %p155 = scmp.eq.s32.totalorder %s21, 1
      %p156 = por %p154, %p155
      %p157 = scmp.ne.s32.totalorder %s149, %s152
      %p158 = scmp.eq.s32.totalorder %s21, 0
      %p159 = por %p157, %p158
      %p160 = scmp.ne.s32.totalorder %s149, %s152
      %p161 = scmp.eq.s32.totalorder %s26, 1
      %p162 = por %p160, %p161
      %p163 = scmp.ne.s32.totalorder %s152, %s153
      %p164 = scmp.eq.s32.totalorder %s26, 0
      %p165 = por %p163, %p164
      %p166 = scmp.ne.s32.totalorder %s152, %s153
      %p167 = scmp.eq.s32.totalorder %s27, 1
      %p168 = por %p166, %p167
      %p170 = scmp.ne.s32.totalorder %s153, %s169
      %p171 = scmp.eq.s32.totalorder %s27, 0
      %p172 = por %p170, %p171
      %s174 = sadd.s32 %s173, 1
      %p177 = scmp.eq.s32.totalorder %s21, 1
      %p178 = scmp.ne.s32.totalorder %s173, %s175
      %p179 = scmp.eq.s32.totalorder %s21, 0
      %p180 = por %p178, %p179
      %p181 = scmp.ne.s32.totalorder %s173, %s175
      %p182 = scmp.eq.s32.totalorder %s26, 1
      %p183 = por %p181, %p182
      %p184 = scmp.ne.s32.totalorder %s175, %s176
      %p185 = scmp.eq.s32.totalorder %s26, 0
      %p186 = por %p184, %p185
      %p187 = scmp.ne.s32.totalorder %s175, %s176
      %p188 = scmp.eq.s32.totalorder %s27, 1
      %p189 = por %p187, %p188
      %p191 = scmp.ne.s32.totalorder %s176, %s190
      %p192 = scmp.eq.s32.totalorder %s27, 0
      %p193 = por %p191, %p192
      %s195 = sadd.s32 %s194, 1
      %p198 = scmp.eq.s32.totalorder %s21, 1
      %p199 = scmp.ne.s32.totalorder %s194, %s196
      %p200 = scmp.eq.s32.totalorder %s21, 0
      %p201 = por %p199, %p200
      %p202 = scmp.ne.s32.totalorder %s194, %s196
      %p203 = scmp.eq.s32.totalorder %s26, 1
      %p204 = por %p202, %p203
      %p205 = scmp.ne.s32.totalorder %s196, %s197
      %p206 = scmp.eq.s32.totalorder %s26, 0
      %p207 = por %p205, %p206
      %p208 = scmp.ne.s32.totalorder %s196, %s197
      %p209 = scmp.eq.s32.totalorder %s27, 1
      %p210 = por %p208, %p209
      %p212 = scmp.ne.s32.totalorder %s197, %s211
      %p213 = scmp.eq.s32.totalorder %s27, 0
      %p214 = por %p212, %p213
      %s215 = ssub.s32 %s28, %s40
      %s216 = ssub.s32 %s29, %s36
      %s217 = sor.u32 %s215, %s216
      %p218 = scmp.eq.s32.totalorder %s217, 0
      %s220 = sadd.s32 %s219, 1
      %s221 = scalar_select %p218, %s219, %s220
      %p224 = pneg %p218
      %p225 = scmp.eq.s32.totalorder %s21, 1
      %p226 = por %p224, %p225
      %p227 = scmp.ne.s32.totalorder %s219, %s222
      %p228 = scmp.eq.s32.totalorder %s21, 0
      %p229 = por %p227, %p228
      %p230 = scmp.ne.s32.totalorder %s219, %s222
      %p231 = scmp.eq.s32.totalorder %s26, 1
      %p232 = por %p230, %p231
      %p233 = scmp.ne.s32.totalorder %s222, %s223
      %p234 = scmp.eq.s32.totalorder %s26, 0
      %p235 = por %p233, %p234
      %p236 = scmp.ne.s32.totalorder %s222, %s223
      %p237 = scmp.eq.s32.totalorder %s27, 1
      %p238 = por %p236, %p237
      %p240 = scmp.ne.s32.totalorder %s223, %s239
      %p241 = scmp.eq.s32.totalorder %s27, 0
      %p242 = por %p240, %p241
      %s243 = ssub.s32 %s28, %s40
      %s244 = ssub.s32 %s29, %s36
      %s245 = sor.u32 %s243, %s244
      %p246 = scmp.eq.s32.totalorder %s245, 0
      %s248 = sadd.s32 %s247, 1
      %s249 = scalar_select %p246, %s247, %s248
      %p252 = pneg %p246
      %p253 = scmp.eq.s32.totalorder %s21, 1
      %p254 = por %p252, %p253
      %p255 = scmp.ne.s32.totalorder %s247, %s250
      %p256 = scmp.eq.s32.totalorder %s21, 0
      %p257 = por %p255, %p256
      %p258 = scmp.ne.s32.totalorder %s247, %s250
      %p259 = scmp.eq.s32.totalorder %s26, 1
      %p260 = por %p258, %p259
      %p261 = scmp.ne.s32.totalorder %s250, %s251
      %p262 = scmp.eq.s32.totalorder %s26, 0
      %p263 = por %p261, %p262
      %p264 = scmp.ne.s32.totalorder %s250, %s251
      %p265 = scmp.eq.s32.totalorder %s27, 1
      %p266 = por %p264, %p265
      %p268 = scmp.ne.s32.totalorder %s251, %s267
      %p269 = scmp.eq.s32.totalorder %s27, 0
      %p270 = por %p268, %p269
      %p271 = scmp.le.s32.totalorder 1, %s21
      %p272 = scmp.lt.s32.totalorder %s21, 3
      %p273 = pnand %p271, %p272
      %p274 = pneg %p273
      // Predicated region
      $region9: #{tpu_custom_call.1} parent=5 // pred_check
        _
      $region10: #{tpu_custom_call.1} parent=5 // pred_check_branch
        %276 = sbr.rel (%p273) target = $region12
      $region11: #{tpu_custom_call.1} parent=5 // pred_region
        %s277 = ssub.s32 %s21, 1
        // Predicated region
        $region13: #{tpu_custom_call.1} parent=11 // pred_check
          %p278 = pneg %p139
        $region14: #{tpu_custom_call.1} parent=11 // pred_check_branch
          %280 = sbr.rel (%p278) target = $region16
        $region15: #{tpu_custom_call.1} parent=11 // pred_region
          %p281 = scmp.lt.s32.totalorder %s31, 0
          %s282 = scalar_select %p281, %s31, 0
          %s283 = smul.addr %s282, 8
          %s284 = scalar_lea.vmem %s3, %s283
        $region16: #{tpu_custom_call.1} parent=11 // pred_fallthru
          _
        // Predicated region
        $region17: #{tpu_custom_call.1} parent=11 // pred_check
          %p285 = pneg %p165
        $region18: #{tpu_custom_call.1} parent=11 // pred_check_branch
          %287 = sbr.rel (%p285) target = $region20
        $region19: #{tpu_custom_call.1} parent=11 // pred_region
          %p288 = scmp.lt.s32.totalorder %s31, 0
          %s289 = scalar_select %p288, %s31, 0
          %s290 = smul.addr %s289, 8
          %s291 = scalar_lea.vmem %s4, %s290
        $region20: #{tpu_custom_call.1} parent=11 // pred_fallthru
          _
        // Predicated region
        $region21: #{tpu_custom_call.1} parent=11 // pred_check
          %p292 = pneg %p186
        $region22: #{tpu_custom_call.1} parent=11 // pred_check_branch
          %294 = sbr.rel (%p292) target = $region24
        $region23: #{tpu_custom_call.1} parent=11 // pred_region
          _
        $region24: #{tpu_custom_call.1} parent=11 // pred_fallthru
          _
        // Predicated region
        $region25: #{tpu_custom_call.1} parent=11 // pred_check
          %p295 = pneg %p207
        $region26: #{tpu_custom_call.1} parent=11 // pred_check_branch
          %297 = sbr.rel (%p295) target = $region28
        $region27: #{tpu_custom_call.1} parent=11 // pred_region
          _
        $region28: #{tpu_custom_call.1} parent=11 // pred_fallthru
          _
      $region12: #{tpu_custom_call.1} parent=5 // pred_fallthru
        _
      %p298 = scmp.lt.s32.totalorder %s21, 2
      // Predicated region
      $region29: #{tpu_custom_call.1} parent=5 // pred_check
        %p299 = pneg %p298
      $region30: #{tpu_custom_call.1} parent=5 // pred_check_branch
        %301 = sbr.rel (%p299) target = $region32
      $region31: #{tpu_custom_call.1} parent=5 // pred_region
        // Predicated region
        $region33: #{tpu_custom_call.1} parent=31 // pred_check
          %p302 = pneg %p55
        $region34: #{tpu_custom_call.1} parent=31 // pred_check_branch
          %304 = sbr.rel (%p302) target = $region36
        $region35: #{tpu_custom_call.1} parent=31 // pred_region
          %s305 = smul.u32 4, %s28
          %p306 = scmp.lt.s32.totalorder %s305, 7
          %s307 = scalar_select %p306, %s305, 7
          %p308 = scmp.lt.s32.totalorder %s29, 0
          %s309 = scalar_select %p308, %s29, 0
          %s310 = sadd.s32 %s309, %s307
          %s311 = smul.addr %s310, 8
          %s312 = scalar_lea.vmem %s0, %s311
          %s313 = smul.u32 4, %s28
        $region36: #{tpu_custom_call.1} parent=31 // pred_fallthru
          _
        // Predicated region
        $region37: #{tpu_custom_call.1} parent=31 // pred_check
          %p314 = pneg %p81
        $region38: #{tpu_custom_call.1} parent=31 // pred_check_branch
          %316 = sbr.rel (%p314) target = $region40
        $region39: #{tpu_custom_call.1} parent=31 // pred_region
          %s317 = smul.u32 4, %s28
          %p318 = scmp.lt.s32.totalorder %s317, 7
          %s319 = scalar_select %p318, %s317, 7
          %s320 = smul.addr %s319, 4
          %s321 = smul.addr %s320, 8
          %s322 = scalar_lea.vmem %s1, %s321
          %s323 = smul.u32 4, %s28
        $region40: #{tpu_custom_call.1} parent=31 // pred_fallthru
          _
        // Predicated region
        $region41: #{tpu_custom_call.1} parent=31 // pred_check
          %p324 = pneg %p107
        $region42: #{tpu_custom_call.1} parent=31 // pred_check_branch
          %326 = sbr.rel (%p324) target = $region44
        $region43: #{tpu_custom_call.1} parent=31 // pred_region
          %s327 = smul.u32 4, %s28
          %p328 = scmp.lt.s32.totalorder %s327, 7
          %s329 = scalar_select %p328, %s327, 7
          %s330 = smul.addr %s329, 8
          %s331 = scalar_lea.vmem %s2, %s330
          %s332 = smul.u32 4, %s28
        $region44: #{tpu_custom_call.1} parent=31 // pred_fallthru
          _
      $region32: #{tpu_custom_call.1} parent=5 // pred_fallthru
        _
      %p333 = scmp.le.s32.totalorder 1, %s21
      %p334 = scmp.lt.s32.totalorder %s21, 3
      %p335 = pnand %p333, %p334
      %p336 = pneg %p335
      // Predicated region
      $region45: #{tpu_custom_call.1} parent=5 // pred_check
        _
      $region46: #{tpu_custom_call.1} parent=5 // pred_check_branch
        %338 = sbr.rel (%p335) target = $region48
      $region47: #{tpu_custom_call.1} parent=5 // pred_region
        %s339 = ssub.s32 %s21, 1
        %s340 = smul.u32 4, %s30
        %p341 = scmp.lt.s32.totalorder %s340, 7
        %s342 = scalar_select %p341, %s340, 7
        %p343 = scmp.lt.s32.totalorder %s31, 0
        %s344 = scalar_select %p343, %s31, 0
        %s345 = sadd.s32 %s344, %s342
        %s346 = smul.addr %s345, 8
        %s347 = scalar_lea.vmem %s0, %s346
        %p348 = pneg %p61
        %p349 = pneg %p58
        %s350 = smul.u32 4, %s30
        %p351 = scmp.lt.s32.totalorder %s350, 7
        %s352 = scalar_select %p351, %s350, 7
        %s353 = smul.addr %s352, 4
        %s354 = smul.addr %s353, 8
        %s355 = scalar_lea.vmem %s1, %s354
        %p356 = pneg %p87
        %p357 = pneg %p84
        %s358 = smul.u32 4, %s30
        %p359 = scmp.lt.s32.totalorder %s358, 7
        %s360 = scalar_select %p359, %s358, 7
        %s361 = smul.addr %s360, 8
        %s362 = scalar_lea.vmem %s2, %s361
        %p363 = pneg %p113
        %p364 = pneg %p110
        %p365 = scmp.lt.s32.totalorder %s31, 0
        %s366 = scalar_select %p365, %s31, 0
        %s367 = smul.addr %s366, 8
        %s368 = scalar_lea.vmem %s3, %s367
        %p369 = pneg %p139
        %p370 = pneg %p136
        %p371 = scmp.lt.s32.totalorder %s31, 0
        %s372 = scalar_select %p371, %s31, 0
        %s373 = smul.addr %s372, 8
        %s374 = scalar_lea.vmem %s4, %s373
        %p375 = pneg %p165
        %p376 = pneg %p162
        %p377 = pneg %p186
        %p378 = pneg %p183
        %p379 = pneg %p207
        %p380 = pneg %p204
        %p381 = pneg %p235
        %p382 = pneg %p232
        %s383 = sand.u32 %s222, 1
        %s384 = scalar_lea.sflag [#allocation4], %s383
        %s385 = sand.u32 %s222, 1
        %s386 = smul.addr %s385, 32
        %s387 = scalar_lea.vmem [#allocation3], %s386
        %p388 = pneg %p263
        %p389 = pneg %p260
        %s390 = sand.u32 %s250, 1
        %s391 = scalar_lea.sflag [#allocation6], %s390
        %s392 = sand.u32 %s250, 1
        %s393 = smul.addr %s392, 32
        %s394 = scalar_lea.vmem [#allocation5], %s393
        %s395 = smul.u32 4, %s30
        %p396 = scmp.lt.s32.totalorder %s395, 7
        %s397 = scalar_select %p396, %s395, 7
        %p398 = scmp.lt.s32.totalorder %s31, 0
        %s399 = scalar_select %p398, %s31, 0
        %s400 = sadd.s32 %s399, %s397
        %s401 = smul.addr %s400, 8
        %s402 = scalar_lea.vmem %s0, %s401
        %s403 = smul.u32 4, %s30
        %s404 = smul.u32 4, %s30
        %p405 = scmp.lt.s32.totalorder %s404, 7
        %s406 = scalar_select %p405, %s404, 7
        %s407 = smul.addr %s406, 4
        %s408 = smul.addr %s407, 8
        %s409 = scalar_lea.vmem %s1, %s408
        %s410 = smul.u32 4, %s30
        %s411 = smul.u32 4, %s30
        %p412 = scmp.lt.s32.totalorder %s411, 7
        %s413 = scalar_select %p412, %s411, 7
        %s414 = smul.addr %s413, 8
        %s415 = scalar_lea.vmem %s2, %s414
        %s416 = smul.u32 4, %s30
        %p417 = scmp.lt.s32.totalorder %s31, 0
        %s418 = scalar_select %p417, %s31, 0
        %s419 = smul.addr %s418, 8
        %s420 = scalar_lea.vmem %s3, %s419
        %p421 = scmp.lt.s32.totalorder %s31, 0
        %s422 = scalar_select %p421, %s31, 0
        %s423 = smul.addr %s422, 8
        %s424 = scalar_lea.vmem %s4, %s423
        %s425 = smul.u32 4, %s30
        %s426 = smul.u32 4, %s30
        %p427 = scmp.eq.s32.totalorder %s31, 0
        // Predicated region
        $region49: #{tpu_custom_call.1} parent=47 // pred_check
          %p428 = pneg %p427
        $region50: #{tpu_custom_call.1} parent=47 // pred_check_branch
          %430 = sbr.rel (%p428) target = $region52
        $region51: #{tpu_custom_call.1} parent=47 // pred_region
          %v431 = vld [vmem:[%s409] sm:$0xff]
          %v432 = vld [vmem:[%s409 + $0x8] sm:$0xff]
          %v433 = vld [vmem:[%s409 + $0x10] sm:$0xff]
          %v434 = vld [vmem:[%s409 + $0x18] sm:$0xff]
          %v435 = vld [vmem:[%s409 + $0x20] sm:$0xff]
          %v436 = vld [vmem:[%s409 + $0x28] sm:$0xff]
          %v437 = vld [vmem:[%s409 + $0x30] sm:$0xff]
          %v438 = vld [vmem:[%s409 + $0x38] sm:$0xff]
          %v439 = vld [vmem:[%s409 + $0x40] sm:$0xff]
          %v440 = vld [vmem:[%s409 + $0x48] sm:$0xff]
          %v441 = vld [vmem:[%s409 + $0x50] sm:$0xff]
          %v442 = vld [vmem:[%s409 + $0x58] sm:$0xff]
          %v443 = vld [vmem:[%s409 + $0x60] sm:$0xff]
          %v444 = vld [vmem:[%s409 + $0x68] sm:$0xff]
          %v445 = vld [vmem:[%s409 + $0x70] sm:$0xff]
          %v446 = vld [vmem:[%s409 + $0x78] sm:$0xff]
          %v447 = vlaneseq
          %v448 = vshrl.u32 %v447, 7
          %v449 = vadd.s32 %v448, 8
          %v450 = vadd.s32 %v448, 16
          %v451 = vadd.s32 %v448, 24
          %vm452 = vcmp.lt.s32.totalorder %v448, 0
          %v453 = vsub.s32 0, %v448
          %v454 = vsel %vm452, %v453, %v448
          %v455 = vshrl.u32 %v454, 1
          %v456 = vand.u32 %v454, 1
          %v457 = vsub.s32 0, %v456
          %v458 = vsel %vm452, %v457, %v456
          %vm459 = vcmp.lt.s32.totalorder %v449, 0
          %v460 = vsub.s32 0, %v449
          %v461 = vsel %vm459, %v460, %v449
          %v462 = vshrl.u32 %v461, 1
          %v463 = vand.u32 %v461, 1
          %v464 = vsub.s32 0, %v463
          %v465 = vsel %vm459, %v464, %v463
          %vm466 = vcmp.lt.s32.totalorder %v450, 0
          %v467 = vsub.s32 0, %v450
          %v468 = vsel %vm466, %v467, %v450
          %v469 = vshrl.u32 %v468, 1
          %v470 = vand.u32 %v468, 1
          %v471 = vsub.s32 0, %v470
          %v472 = vsel %vm466, %v471, %v470
          %vm473 = vcmp.lt.s32.totalorder %v451, 0
          %v474 = vsub.s32 0, %v451
          %v475 = vsel %vm473, %v474, %v451
          %v476 = vshrl.u32 %v475, 1
          %v477 = vand.u32 %v475, 1
          %v478 = vsub.s32 0, %v477
          %v479 = vsel %vm473, %v478, %v477
          %vm480 = vcmp.ne.s32.totalorder %v458, 0
          %vm481 = vcmp.ne.s32.totalorder %v465, 0
          %vm482 = vcmp.ne.s32.totalorder %v472, 0
          %vm483 = vcmp.ne.s32.totalorder %v479, 0
          %vm484 = vcmp.lt.s32.totalorder %v458, 0
          %vm485 = vcmp.lt.s32.totalorder %v465, 0
          %vm486 = vcmp.lt.s32.totalorder %v472, 0
          %vm487 = vcmp.lt.s32.totalorder %v479, 0
          %vm488 = vmand %vm484, %vm480
          %vm489 = vmand %vm485, %vm481
          %vm490 = vmand %vm486, %vm482
          %vm491 = vmand %vm487, %vm483
          %v492 = vadd.s32 %v458, 2
          %v493 = vadd.s32 %v465, 2
          %v494 = vadd.s32 %v472, 2
          %v495 = vadd.s32 %v479, 2
          %v496 = vsel %vm488, %v492, %v458
          %v497 = vsel %vm489, %v493, %v465
          %v498 = vsel %vm490, %v494, %v472
          %v499 = vsel %vm491, %v495, %v479
          %vm500 = vcmp.eq.s32.totalorder %v496, 0
          %vm501 = vcmp.eq.s32.totalorder %v497, 0
          %vm502 = vcmp.eq.s32.totalorder %v498, 0
          %vm503 = vcmp.eq.s32.totalorder %v499, 0
          %v504 = vrot.slane %v431, 1
          %v505 = vrot.slane %v435, 1
          %v506 = vrot.slane %v439, 1
          %v507 = vrot.slane %v443, 1
          %v508 = vrot.slane %v432, 1
          %v509 = vrot.slane %v436, 1
          %v510 = vrot.slane %v440, 1
          %v511 = vrot.slane %v444, 1
          %v512 = vrot.slane %v433, 1
          %v513 = vrot.slane %v437, 1
          %v514 = vrot.slane %v441, 1
          %v515 = vrot.slane %v445, 1
          %v516 = vrot.slane %v434, 1
          %v517 = vrot.slane %v438, 1
          %v518 = vrot.slane %v442, 1
          %v519 = vrot.slane %v446, 1
          %vm520 = vcmp.lt.s32.totalorder %v448, 7
          %v521 = vsel %vm520, %v512, %v516
          %v522 = vsel %vm520, %v513, %v517
          %v523 = vsel %vm520, %v514, %v518
          %v524 = vsel %vm520, %v515, %v519
          %v525 = vsel %vm520, %v508, %v512
          %v526 = vsel %vm520, %v509, %v513
          %v527 = vsel %vm520, %v510, %v514
          %v528 = vsel %vm520, %v511, %v515
          %v529 = vsel %vm520, %v504, %v508
          %v530 = vsel %vm520, %v505, %v509
          %v531 = vsel %vm520, %v506, %v510
          %v532 = vsel %vm520, %v507, %v511
          %v533 = vsel %vm520, %v516, %v504
          %v534 = vsel %vm520, %v517, %v505
          %v535 = vsel %vm520, %v518, %v506
          %v536 = vsel %vm520, %v519, %v507
          %v537 = vrot.slane %v431, 7
          %v538 = vrot.slane %v435, 7
          %v539 = vrot.slane %v439, 7
          %v540 = vrot.slane %v443, 7
          %v541 = vrot.slane %v432, 7
          %v542 = vrot.slane %v436, 7
          %v543 = vrot.slane %v440, 7
          %v544 = vrot.slane %v444, 7
          %v545 = vrot.slane %v433, 7
          %v546 = vrot.slane %v437, 7
          %v547 = vrot.slane %v441, 7
          %v548 = vrot.slane %v445, 7
          %v549 = vrot.slane %v434, 7
          %v550 = vrot.slane %v438, 7
          %v551 = vrot.slane %v442, 7
          %v552 = vrot.slane %v446, 7
          %vm553 = vcmp.lt.s32.totalorder %v448, 1
          %v554 = vsel %vm553, %v545, %v549
          %v555 = vsel %vm553, %v546, %v550
          %v556 = vsel %vm553, %v547, %v551
          %v557 = vsel %vm553, %v548, %v552
          %v558 = vsel %vm553, %v541, %v545
          %v559 = vsel %vm553, %v542, %v546
          %v560 = vsel %vm553, %v543, %v547
          %v561 = vsel %vm553, %v544, %v548
          %v562 = vsel %vm553, %v537, %v541
          %v563 = vsel %vm553, %v538, %v542
          %v564 = vsel %vm553, %v539, %v543
          %v565 = vsel %vm553, %v540, %v544
          %v566 = vsel %vm553, %v549, %v537
          %v567 = vsel %vm553, %v550, %v538
          %v568 = vsel %vm553, %v551, %v539
          %v569 = vsel %vm553, %v552, %v540
          %v570 = vld [vmem:[%s5] sm:$0xff]
          %v571 = vld [vmem:[%s5 + $0x8] sm:$0xff]
          %v572 = vld [vmem:[%s5 + $0x10] sm:$0xff]
          %v573 = vld [vmem:[%s5 + $0x18] sm:$0xff]
          %v574 = vmul.f32 %v431, %v570
          %v575 = vmul.f32 %v432, %v571
          %v576 = vmul.f32 %v433, %v572
          %v577 = vmul.f32 %v434, %v573
          %v578 = vmul.f32 %v435, %v570
          %v579 = vmul.f32 %v436, %v571
          %v580 = vmul.f32 %v437, %v572
          %v581 = vmul.f32 %v438, %v573
          %v582 = vmul.f32 %v439, %v570
          %v583 = vmul.f32 %v440, %v571
          %v584 = vmul.f32 %v441, %v572
          %v585 = vmul.f32 %v442, %v573
          %v586 = vmul.f32 %v443, %v570
          %v587 = vmul.f32 %v444, %v571
          %v588 = vmul.f32 %v445, %v572
          %v589 = vmul.f32 %v446, %v573
          %v590 = vsel %vm500, 1, 0
          %v591 = vsel %vm501, 1, 0
          %v592 = vsel %vm502, 1, 0
          %v593 = vsel %vm503, 1, 0
          %vm594 = vcmp.eq.s32.totalorder %v590, 1
          %vm595 = vcmp.eq.s32.totalorder %v591, 1
          %vm596 = vcmp.eq.s32.totalorder %v592, 1
          %vm597 = vcmp.eq.s32.totalorder %v593, 1
          %v598 = vsel %vm594, %v529, %v566
          %v599 = vsel %vm595, %v525, %v562
          %v600 = vsel %vm596, %v521, %v558
          %v601 = vsel %vm597, %v533, %v554
          %v602 = vsel %vm594, %v530, %v567
          %v603 = vsel %vm595, %v526, %v563
          %v604 = vsel %vm596, %v522, %v559
          %v605 = vsel %vm597, %v534, %v555
          %v606 = vsel %vm594, %v531, %v568
          %v607 = vsel %vm595, %v527, %v564
          %v608 = vsel %vm596, %v523, %v560
          %v609 = vsel %vm597, %v535, %v556
          %v610 = vsel %vm594, %v532, %v569
          %v611 = vsel %vm595, %v528, %v565
          %v612 = vsel %vm596, %v524, %v561
          %v613 = vsel %vm597, %v536, %v557
          %v614 = vld [vmem:[%s6] sm:$0xff]
          %v615 = vld [vmem:[%s6 + $0x8] sm:$0xff]
          %v616 = vld [vmem:[%s6 + $0x10] sm:$0xff]
          %v617 = vld [vmem:[%s6 + $0x18] sm:$0xff]
          %v618 = vmul.f32 %v598, %v614
          %v619 = vmul.f32 %v599, %v615
          %v620 = vmul.f32 %v600, %v616
          %v621 = vmul.f32 %v601, %v617
          %v622 = vmul.f32 %v602, %v614
          %v623 = vmul.f32 %v603, %v615
          %v624 = vmul.f32 %v604, %v616
          %v625 = vmul.f32 %v605, %v617
          %v626 = vmul.f32 %v606, %v614
          %v627 = vmul.f32 %v607, %v615
          %v628 = vmul.f32 %v608, %v616
          %v629 = vmul.f32 %v609, %v617
          %v630 = vmul.f32 %v610, %v614
          %v631 = vmul.f32 %v611, %v615
          %v632 = vmul.f32 %v612, %v616
          %v633 = vmul.f32 %v613, %v617
          %v634 = vadd.f32 %v574, %v618
          %v635 = vadd.f32 %v575, %v619
          %v636 = vadd.f32 %v576, %v620
          %v637 = vadd.f32 %v577, %v621
          %v638 = vadd.f32 %v578, %v622
          %v639 = vadd.f32 %v579, %v623
          %v640 = vadd.f32 %v580, %v624
          %v641 = vadd.f32 %v581, %v625
          %v642 = vadd.f32 %v582, %v626
          %v643 = vadd.f32 %v583, %v627
          %v644 = vadd.f32 %v584, %v628
          %v645 = vadd.f32 %v585, %v629
          %v646 = vadd.f32 %v586, %v630
          %v647 = vadd.f32 %v587, %v631
          %v648 = vadd.f32 %v588, %v632
          %v649 = vadd.f32 %v589, %v633
          %vm650 = vcmask 64512
          %651 = vst.msk [vmem:[#allocation2] sm:$0xff] %vm650, %v634
          %652 = vst.msk [vmem:[#allocation2 + $0x8] sm:$0xff] %vm650, %v635
          %653 = vst.msk [vmem:[#allocation2 + $0x10] sm:$0xff] %vm650, %v636
          %654 = vst.msk [vmem:[#allocation2 + $0x18] sm:$0xff] %vm650, %v637
          %655 = vst.msk [vmem:[#allocation2 + $0x20] sm:$0xff] %vm650, %v638
          %656 = vst.msk [vmem:[#allocation2 + $0x28] sm:$0xff] %vm650, %v639
          %657 = vst.msk [vmem:[#allocation2 + $0x30] sm:$0xff] %vm650, %v640
          %658 = vst.msk [vmem:[#allocation2 + $0x38] sm:$0xff] %vm650, %v641
          %659 = vst.msk [vmem:[#allocation2 + $0x40] sm:$0xff] %vm650, %v642
          %660 = vst.msk [vmem:[#allocation2 + $0x48] sm:$0xff] %vm650, %v643
          %661 = vst.msk [vmem:[#allocation2 + $0x50] sm:$0xff] %vm650, %v644
          %662 = vst.msk [vmem:[#allocation2 + $0x58] sm:$0xff] %vm650, %v645
          %663 = vst.msk [vmem:[#allocation2 + $0x60] sm:$0xff] %vm650, %v646
          %664 = vst.msk [vmem:[#allocation2 + $0x68] sm:$0xff] %vm650, %v647
          %665 = vst.msk [vmem:[#allocation2 + $0x70] sm:$0xff] %vm650, %v648
          %666 = vst.msk [vmem:[#allocation2 + $0x78] sm:$0xff] %vm650, %v649
        $region52: #{tpu_custom_call.1} parent=47 // pred_fallthru
          _
        %v667 = vld [vmem:[%s402] sm:$0xff]
        %v668 = vld [vmem:[%s402 + $0x8] sm:$0xff]
        %v669 = vld [vmem:[%s402 + $0x10] sm:$0xff]
        %v670 = vld [vmem:[%s402 + $0x18] sm:$0xff]
        %v671 = vlaneseq
        %v672 = vand.u32 %v671, 127
        %vm673 = vcmp.lt.s32.totalorder %v672, 0
        %v674 = vsub.s32 0, %v672
        %v675 = vsel %vm673, %v674, %v672
        %v676 = vshrl.u32 %v675, 1
        %v677 = vand.u32 %v675, 1
        %v678 = vsub.s32 0, %v677
        %v679 = vsel %vm673, %v678, %v677
        %vm680 = vcmp.ne.s32.totalorder %v679, 0
        %vm681 = vcmp.lt.s32.totalorder %v679, 0
        %vm682 = vmand %vm681, %vm680
        %v683 = vadd.s32 %v679, 2
        %v684 = vsel %vm682, %v683, %v679
        %vm685 = vcmp.eq.s32.totalorder %v684, 0
        %vm686 = vcmask 1047808
        %687 = vrot.lane.b32.xlu0 %v667, 32
        %v688 = vpop.permute.xlu0 %687
        %v689 = vsel %vm686, %v688, %v667
        %690 = vrot.lane.b32.xlu0 %v668, 32
        %v691 = vpop.permute.xlu0 %690
        %v692 = vsel %vm686, %v691, %v668
        %693 = vrot.lane.b32.xlu0 %v669, 32
        %v694 = vpop.permute.xlu0 %693
        %v695 = vsel %vm686, %v694, %v669
        %696 = vrot.lane.b32.xlu0 %v670, 32
        %v697 = vpop.permute.xlu0 %696
        %v698 = vsel %vm686, %v697, %v670
        %699 = vrot.lane.b32.xlu0 %v689, 32
        %v700 = vpop.permute.xlu0 %699
        %701 = vrot.lane.b32.xlu0 %v692, 32
        %v702 = vpop.permute.xlu0 %701
        %703 = vrot.lane.b32.xlu0 %v695, 32
        %v704 = vpop.permute.xlu0 %703
        %705 = vrot.lane.b32.xlu0 %v698, 32
        %v706 = vpop.permute.xlu0 %705
        %v707 = vsel %vm686, %v700, %v667
        %v708 = vsel %vm686, %v702, %v668
        %v709 = vsel %vm686, %v704, %v669
        %v710 = vsel %vm686, %v706, %v670
        %v711 = vld [vmem:[%s420] sm:$0xff]
        %v712 = vmul.f32 %v667, %v711
        %v713 = vmul.f32 %v668, %v711
        %v714 = vmul.f32 %v669, %v711
        %v715 = vmul.f32 %v670, %v711
        %v716 = vsel %vm685, 1, 0
        %vm717 = vcmp.eq.s32.totalorder %v716, 1
        %722 = vrot.lane.b32.xlu0 %v707, 127
        %v723 = vpop.permute.xlu0 %722
        %724 = vrot.lane.b32.xlu0 %v708, 127
        %v725 = vpop.permute.xlu0 %724
        %726 = vrot.lane.b32.xlu0 %v709, 127
        %v727 = vpop.permute.xlu0 %726
        %728 = vrot.lane.b32.xlu0 %v710, 127
        %v729 = vpop.permute.xlu0 %728
        %734 = vrot.lane.b32.xlu0 %v707, 97
        %v735 = vpop.permute.xlu0 %734
        %736 = vrot.lane.b32.xlu0 %v708, 97
        %v737 = vpop.permute.xlu0 %736
        %738 = vrot.lane.b32.xlu0 %v709, 97
        %v739 = vpop.permute.xlu0 %738
        %740 = vrot.lane.b32.xlu0 %v710, 97
        %v741 = vpop.permute.xlu0 %740
        %v746 = vsel %vm717, %v723, %v735
        %v747 = vsel %vm717, %v725, %v737
        %v748 = vsel %vm717, %v727, %v739
        %v749 = vsel %vm717, %v729, %v741
        %v750 = vld [vmem:[%s424] sm:$0xff]
        %v751 = vmul.f32 %v746, %v750
        %v752 = vmul.f32 %v747, %v750
        %v753 = vmul.f32 %v748, %v750
        %v754 = vmul.f32 %v749, %v750
        %v755 = vadd.f32 %v712, %v751
        %v756 = vadd.f32 %v713, %v752
        %v757 = vadd.f32 %v714, %v753
        %v758 = vadd.f32 %v715, %v754
        %v759 = vld [vmem:[#allocation2] sm:$0xff]
        %v760 = vld [vmem:[#allocation2 + $0x8] sm:$0xff]
        %v761 = vld [vmem:[#allocation2 + $0x10] sm:$0xff]
        %v762 = vld [vmem:[#allocation2 + $0x18] sm:$0xff]
        %v763 = vld [vmem:[#allocation2 + $0x20] sm:$0xff]
        %v764 = vld [vmem:[#allocation2 + $0x28] sm:$0xff]
        %v765 = vld [vmem:[#allocation2 + $0x30] sm:$0xff]
        %v766 = vld [vmem:[#allocation2 + $0x38] sm:$0xff]
        %v767 = vld [vmem:[#allocation2 + $0x40] sm:$0xff]
        %v768 = vld [vmem:[#allocation2 + $0x48] sm:$0xff]
        %v769 = vld [vmem:[#allocation2 + $0x50] sm:$0xff]
        %v770 = vld [vmem:[#allocation2 + $0x58] sm:$0xff]
        %v771 = vld [vmem:[#allocation2 + $0x60] sm:$0xff]
        %v772 = vld [vmem:[#allocation2 + $0x68] sm:$0xff]
        %v773 = vld [vmem:[#allocation2 + $0x70] sm:$0xff]
        %v774 = vld [vmem:[#allocation2 + $0x78] sm:$0xff]
        %vm775 = vcmask 261120
        %v777 = vsel %vm775, %v755, 0
        %779 = vmatpush.msra.mxu0 0.0
        %780 = vmatpush.msra.mxu0 0.0
        %781 = vmatpush.msra.mxu0 0.0
        %782 = vmatpush.msra.mxu0 0.0
        %783 = vmatpush.msra.mxu0 0.0
        %784 = vmatpush.msra.mxu0 0.0
        %785 = vmatpush.msra.mxu0 0.0
        %786 = vmatpush.msra.mxu0 0.0
        %787 = vmatpush.msra.mxu0 0.0
        %788 = vmatpush.msra.mxu0 0.0
        %789 = vmatpush.msra.mxu0 0.0
        %790 = vmatpush.msra.mxu0 0.0
        %791 = vmatpush.msra.mxu0 %v762
        %792 = vmatpush.msra.mxu0 %v761
        %793 = vmatpush.msra.mxu0 %v760
        %794 = vmatpush.msra.mxu0 %v759
        %795 = vmatmul.f32.gmra.mxu0 %v777
        %v796 = vpop.f32.mrf.mxu0
        %v797 = vadd.f32 0.0, %v796
        %798 = vdwg.mxu0
        %v800 = vsel %vm775, %v756, 0
        %802 = vmatpush.msra.mxu0 0.0
        %803 = vmatpush.msra.mxu0 0.0
        %804 = vmatpush.msra.mxu0 0.0
        %805 = vmatpush.msra.mxu0 0.0
        %806 = vmatpush.msra.mxu0 0.0
        %807 = vmatpush.msra.mxu0 0.0
        %808 = vmatpush.msra.mxu0 0.0
        %809 = vmatpush.msra.mxu0 0.0
        %810 = vmatpush.msra.mxu0 0.0
        %811 = vmatpush.msra.mxu0 0.0
        %812 = vmatpush.msra.mxu0 0.0
        %813 = vmatpush.msra.mxu0 0.0
        %814 = vmatpush.msra.mxu0 %v766
        %815 = vmatpush.msra.mxu0 %v765
        %816 = vmatpush.msra.mxu0 %v764
        %817 = vmatpush.msra.mxu0 %v763
        %818 = vmatmul.f32.gmra.mxu0 %v800
        %v819 = vpop.f32.mrf.mxu0
        %v820 = vadd.f32 0.0, %v819
        %821 = vdwg.mxu0
        %v823 = vsel %vm775, %v757, 0
        %825 = vmatpush.msra.mxu0 0.0
        %826 = vmatpush.msra.mxu0 0.0
        %827 = vmatpush.msra.mxu0 0.0
        %828 = vmatpush.msra.mxu0 0.0
        %829 = vmatpush.msra.mxu0 0.0
        %830 = vmatpush.msra.mxu0 0.0
        %831 = vmatpush.msra.mxu0 0.0
        %832 = vmatpush.msra.mxu0 0.0
        %833 = vmatpush.msra.mxu0 0.0
        %834 = vmatpush.msra.mxu0 0.0
        %835 = vmatpush.msra.mxu0 0.0
        %836 = vmatpush.msra.mxu0 0.0
        %837 = vmatpush.msra.mxu0 %v770
        %838 = vmatpush.msra.mxu0 %v769
        %839 = vmatpush.msra.mxu0 %v768
        %840 = vmatpush.msra.mxu0 %v767
        %841 = vmatmul.f32.gmra.mxu0 %v823
        %v842 = vpop.f32.mrf.mxu0
        %v843 = vadd.f32 0.0, %v842
        %844 = vdwg.mxu0
        %v846 = vsel %vm775, %v758, 0
        %848 = vmatpush.msra.mxu0 0.0
        %849 = vmatpush.msra.mxu0 0.0
        %850 = vmatpush.msra.mxu0 0.0
        %851 = vmatpush.msra.mxu0 0.0
        %852 = vmatpush.msra.mxu0 0.0
        %853 = vmatpush.msra.mxu0 0.0
        %854 = vmatpush.msra.mxu0 0.0
        %855 = vmatpush.msra.mxu0 0.0
        %856 = vmatpush.msra.mxu0 0.0
        %857 = vmatpush.msra.mxu0 0.0
        %858 = vmatpush.msra.mxu0 0.0
        %859 = vmatpush.msra.mxu0 0.0
        %860 = vmatpush.msra.mxu0 %v774
        %861 = vmatpush.msra.mxu0 %v773
        %862 = vmatpush.msra.mxu0 %v772
        %863 = vmatpush.msra.mxu0 %v771
        %864 = vmatmul.f32.gmra.mxu0 %v846
        %v865 = vpop.f32.mrf.mxu0
        %v866 = vadd.f32 0.0, %v865
        %867 = vdwg.mxu0
        %vm868 = vcmask 64512
        %v869 = vsel %vm868, %v797, -inf
        %870 = vmax.xlane.f32.xlu0 %v869
        %v871 = vpop.xlane.xlu0 %870
        %v872 = vsel %vm868, %v820, -inf
        %873 = vmax.xlane.f32.xlu0 %v872
        %v874 = vpop.xlane.xlu0 %873
        %v875 = vsel %vm868, %v843, -inf
        %876 = vmax.xlane.f32.xlu0 %v875
        %v877 = vpop.xlane.xlu0 %876
        %v878 = vsel %vm868, %v866, -inf
        %879 = vmax.xlane.f32.xlu0 %v878
        %v880 = vpop.xlane.xlu0 %879
        %v881 = vsub.f32 %v797, %v871
        %v882 = vsub.f32 %v820, %v874
        %v883 = vsub.f32 %v843, %v877
        %v884 = vsub.f32 %v866, %v880
        %v885 = vmul.f32 %v881, 1.442695
        %v886 = vpow.pop %v885
        %v887 = vmul.f32 %v882, 1.442695
        %v888 = vpow.pop %v887
        %v889 = vmul.f32 %v883, 1.442695
        %v890 = vpow.pop %v889
        %v891 = vmul.f32 %v884, 1.442695
        %v892 = vpow.pop %v891
        %v893 = vsel %vm868, %v886, 0.0
        %894 = vadd.xlane.f32.xlu0 %v893
        %v895 = vpop.xlane.xlu0 %894
        %v896 = vsel %vm868, %v888, 0.0
        %897 = vadd.xlane.f32.xlu0 %v896
        %v898 = vpop.xlane.xlu0 %897
        %v899 = vsel %vm868, %v890, 0.0
        %900 = vadd.xlane.f32.xlu0 %v899
        %v901 = vpop.xlane.xlu0 %900
        %v902 = vsel %vm868, %v892, 0.0
        %903 = vadd.xlane.f32.xlu0 %v902
        %v904 = vpop.xlane.xlu0 %903
        %v905 = vrcp.pop %v895
        %v906 = vrcp.pop %v898
        %v907 = vrcp.pop %v901
        %v908 = vrcp.pop %v904
        %v909 = vmul.f32 %v895, %v905
        %v910 = vmul.f32 %v898, %v906
        %v911 = vmul.f32 %v901, %v907
        %v912 = vmul.f32 %v904, %v908
        %v913 = vsub.f32 2.0, %v909
        %v914 = vsub.f32 2.0, %v910
        %v915 = vsub.f32 2.0, %v911
        %v916 = vsub.f32 2.0, %v912
        %v917 = vmul.f32 %v905, %v913
        %v918 = vmul.f32 %v906, %v914
        %v919 = vmul.f32 %v907, %v915
        %v920 = vmul.f32 %v908, %v916
        %v921 = vmul.f32 %v886, %v917
        %v922 = vmul.f32 %v888, %v918
        %v923 = vmul.f32 %v890, %v919
        %v924 = vmul.f32 %v892, %v920
        %v925 = vld [vmem:[%s415] sm:$0xff]
        %v926 = vld [vmem:[%s415 + $0x8] sm:$0xff]
        %v927 = vld [vmem:[%s415 + $0x10] sm:$0xff]
        %v928 = vld [vmem:[%s415 + $0x18] sm:$0xff]
        %v930 = vsel %vm868, %v921, 0
        %932 = vmatpush.msra.mxu0 0.0
        %933 = vmatpush.msra.mxu0 0.0
        %934 = vmatpush.msra.mxu0 0.0
        %935 = vmatpush.msra.mxu0 0.0
        %936 = vmatpush.msra.mxu0 0.0
        %937 = vmatpush.msra.mxu0 0.0
        %938 = vmatpush.msra.mxu0 0.0
        %939 = vmatpush.msra.mxu0 0.0
        %940 = vmatpush.msra.mxu0 0.0
        %941 = vmatpush.msra.mxu0 0.0
        %942 = vmatpush.msra.mxu0 0.0
        %943 = vmatpush.msra.mxu0 0.0
        %944 = vmatpush.msra.mxu0 0.0
        %945 = vmatpush.msra.mxu0 0.0
        %946 = vmatpush.msra.mxu0 0.0
        %947 = vmatpush.msra.mxu0 %v925
        %948 = vmatmul.f32.gmra.mxu0 %v930
        %v949 = vpop.f32.mrf.mxu0
        %v950 = vadd.f32 0.0, %v949
        %951 = vdwg.mxu0
        %v953 = vsel %vm868, %v922, 0
        %955 = vmatpush.msra.mxu0 0.0
        %956 = vmatpush.msra.mxu0 0.0
        %957 = vmatpush.msra.mxu0 0.0
        %958 = vmatpush.msra.mxu0 0.0
        %959 = vmatpush.msra.mxu0 0.0
        %960 = vmatpush.msra.mxu0 0.0
        %961 = vmatpush.msra.mxu0 0.0
        %962 = vmatpush.msra.mxu0 0.0
        %963 = vmatpush.msra.mxu0 0.0
        %964 = vmatpush.msra.mxu0 0.0
        %965 = vmatpush.msra.mxu0 0.0
        %966 = vmatpush.msra.mxu0 0.0
        %967 = vmatpush.msra.mxu0 0.0
        %968 = vmatpush.msra.mxu0 0.0
        %969 = vmatpush.msra.mxu0 0.0
        %970 = vmatpush.msra.mxu0 %v926
        %971 = vmatmul.f32.gmra.mxu0 %v953
        %v972 = vpop.f32.mrf.mxu0
        %v973 = vadd.f32 0.0, %v972
        %974 = vdwg.mxu0
        %v976 = vsel %vm868, %v923, 0
        %978 = vmatpush.msra.mxu0 0.0
        %979 = vmatpush.msra.mxu0 0.0
        %980 = vmatpush.msra.mxu0 0.0
        %981 = vmatpush.msra.mxu0 0.0
        %982 = vmatpush.msra.mxu0 0.0
        %983 = vmatpush.msra.mxu0 0.0
        %984 = vmatpush.msra.mxu0 0.0
        %985 = vmatpush.msra.mxu0 0.0
        %986 = vmatpush.msra.mxu0 0.0
        %987 = vmatpush.msra.mxu0 0.0
        %988 = vmatpush.msra.mxu0 0.0
        %989 = vmatpush.msra.mxu0 0.0
        %990 = vmatpush.msra.mxu0 0.0
        %991 = vmatpush.msra.mxu0 0.0
        %992 = vmatpush.msra.mxu0 0.0
        %993 = vmatpush.msra.mxu0 %v927
        %994 = vmatmul.f32.gmra.mxu0 %v976
        %v995 = vpop.f32.mrf.mxu0
        %v996 = vadd.f32 0.0, %v995
        %997 = vdwg.mxu0
        %v999 = vsel %vm868, %v924, 0
        %1001 = vmatpush.msra.mxu0 0.0
        %1002 = vmatpush.msra.mxu0 0.0
        %1003 = vmatpush.msra.mxu0 0.0
        %1004 = vmatpush.msra.mxu0 0.0
        %1005 = vmatpush.msra.mxu0 0.0
        %1006 = vmatpush.msra.mxu0 0.0
        %1007 = vmatpush.msra.mxu0 0.0
        %1008 = vmatpush.msra.mxu0 0.0
        %1009 = vmatpush.msra.mxu0 0.0
        %1010 = vmatpush.msra.mxu0 0.0
        %1011 = vmatpush.msra.mxu0 0.0
        %1012 = vmatpush.msra.mxu0 0.0
        %1013 = vmatpush.msra.mxu0 0.0
        %1014 = vmatpush.msra.mxu0 0.0
        %1015 = vmatpush.msra.mxu0 0.0
        %1016 = vmatpush.msra.mxu0 %v928
        %1017 = vmatmul.f32.gmra.mxu0 %v999
        %v1018 = vpop.f32.mrf.mxu0
        %v1019 = vadd.f32 0.0, %v1018
        %1020 = vdwg.mxu0
        %1021 = vst.msk [vmem:[%s387] sm:$0xff] %vm775, %v950
        %1022 = vst.msk [vmem:[%s387 + $0x8] sm:$0xff] %vm775, %v973
        %1023 = vst.msk [vmem:[%s387 + $0x10] sm:$0xff] %vm775, %v996
        %1024 = vst.msk [vmem:[%s387 + $0x18] sm:$0xff] %vm775, %v1019
        %1025 = vst.msk [vmem:[%s394] sm:$0xff] %vm868, %v921
        %1026 = vst.msk [vmem:[%s394 + $0x8] sm:$0xff] %vm868, %v922
        %1027 = vst.msk [vmem:[%s394 + $0x10] sm:$0xff] %vm868, %v923
        %1028 = vst.msk [vmem:[%s394 + $0x18] sm:$0xff] %vm868, %v924
        %s1029 = sand.u32 %s222, 1
        %s1030 = scalar_lea.sflag [#allocation4], %s1029
        %s1031 = sand.u32 %s222, 1
        %s1032 = smul.addr %s1031, 32
        %s1033 = scalar_lea.vmem [#allocation3], %s1032
        %s1034 = sand.u32 %s250, 1
        %s1035 = scalar_lea.sflag [#allocation6], %s1034
        %s1036 = sand.u32 %s250, 1
        %s1037 = smul.addr %s1036, 32
        %s1038 = scalar_lea.vmem [#allocation5], %s1037
        // Predicated region
        $region53: #{tpu_custom_call.1} parent=47 // pred_check
          %p1039 = pneg %p232
        $region54: #{tpu_custom_call.1} parent=47 // pred_check_branch
          %1041 = sbr.rel (%p1039) target = $region56
        $region55: #{tpu_custom_call.1} parent=47 // pred_region
          %s1042 = smul.u32 4, %s30
          %1044 = vsyncadd %s1030, 0
          %s1045 = sadd.s32 %s31, %s1042
          %s1046 = smul.addr %s1045, 8
          %s1047 = scalar_lea.hbm %s7, %s1046
          %s1048 = sshll.u32 %s1033, 4
          %s1049 = int_to_ptr.vmem [resolvable:$true] %s1048
          %s1050 = sshll.u32 %s1047, 4
          %s1051 = int_to_ptr.hbm [resolvable:$true] %s1050
          %1056 = dma.vmem_to_hbm [thread:$0]  %s1049, 512, %s1051, %s1030, 128, 128, 8
        $region56: #{tpu_custom_call.1} parent=47 // pred_fallthru
          _
        // Predicated region
        $region57: #{tpu_custom_call.1} parent=47 // pred_check
          %p1057 = pneg %p260
        $region58: #{tpu_custom_call.1} parent=47 // pred_check_branch
          %1059 = sbr.rel (%p1057) target = $region60
        $region59: #{tpu_custom_call.1} parent=47 // pred_region
          %s1060 = smul.u32 4, %s30
          %1062 = vsyncadd %s1035, 0
          %s1063 = sadd.s32 %s31, %s1060
          %s1064 = smul.addr %s1063, 8
          %s1065 = scalar_lea.hbm %s8, %s1064
          %s1066 = sshll.u32 %s1038, 4
          %s1067 = int_to_ptr.vmem [resolvable:$true] %s1066
          %s1068 = sshll.u32 %s1065, 4
          %s1069 = int_to_ptr.hbm [resolvable:$true] %s1068
          %1074 = dma.vmem_to_hbm [thread:$0]  %s1067, 512, %s1069, %s1035, 128, 128, 8
        $region60: #{tpu_custom_call.1} parent=47 // pred_fallthru
          _
      $region48: #{tpu_custom_call.1} parent=5 // pred_fallthru
        _
      %p1075 = scmp.le.s32.totalorder 2, %s21
      // Predicated region
      $region61: #{tpu_custom_call.1} parent=5 // pred_check
        %p1076 = pneg %p1075
      $region62: #{tpu_custom_call.1} parent=5 // pred_check_branch
        %1078 = sbr.rel (%p1076) target = $region64
      $region63: #{tpu_custom_call.1} parent=5 // pred_region
        %s1079 = ssub.s32 %s21, 2
        // Predicated region
        $region65: #{tpu_custom_call.1} parent=63 // pred_check
          %p1080 = pneg %p238
        $region66: #{tpu_custom_call.1} parent=63 // pred_check_branch
          %1082 = sbr.rel (%p1080) target = $region68
        $region67: #{tpu_custom_call.1} parent=63 // pred_region
          %s1083 = sand.u32 %s223, 1
          %s1084 = scalar_lea.sflag [#allocation4], %s1083
          %s1085 = sand.u32 %s223, 1
          %s1086 = smul.addr %s1085, 32
          %s1087 = scalar_lea.vmem [#allocation3], %s1086
          %1089 = dma.done %s1084, 512
        $region68: #{tpu_custom_call.1} parent=63 // pred_fallthru
          _
        // Predicated region
        $region69: #{tpu_custom_call.1} parent=63 // pred_check
          %p1090 = pneg %p266
        $region70: #{tpu_custom_call.1} parent=63 // pred_check_branch
          %1092 = sbr.rel (%p1090) target = $region72
        $region71: #{tpu_custom_call.1} parent=63 // pred_region
          %s1093 = sand.u32 %s251, 1
          %s1094 = scalar_lea.sflag [#allocation6], %s1093
          %s1095 = sand.u32 %s251, 1
          %s1096 = smul.addr %s1095, 32
          %s1097 = scalar_lea.vmem [#allocation5], %s1096
          %1099 = dma.done %s1094, 512
        $region72: #{tpu_custom_call.1} parent=63 // pred_fallthru
          _
      $region64: #{tpu_custom_call.1} parent=5 // pred_fallthru
        _
    $region6: #{tpu_custom_call.1} parent=1 // loop_footer
      %s25 = sadd.s32 1, %s21
    $region7: #{tpu_custom_call.1} parent=1 // loop_footer_branch
      %20 = sbr.rel target = $region3
    $region8: #{tpu_custom_call.1} parent=1 // loop_exit
      _
    %1100 = vsyncpa [#allocation4], 1
    %s1101 = scalar_lea.sflag [#allocation4], 1
    %1102 = vsyncpa %s1101, 1
    %1103 = vsyncpa [#allocation6], 1
    %s1104 = scalar_lea.sflag [#allocation6], 1
    %1105 = vsyncpa %s1104, 1

</llo_original>
